<compile_context>
chip_gen: v5e
topology: v5e:2x2
jax: 0.10.0
libtpu: 0.0.40
codegen_flags: <defaults>
</compile_context>

<pallas_src>
import functools

import jax
import jax.numpy as jnp
from jax import lax
from jax.experimental import pallas as pl
from jax.experimental.pallas import tpu as pltpu

_LANES = 128
_ACC_ROWS = 64            # 8 independent f32 accumulator vregs
_N_CORES = 2              # parallel grid axis; uses both TCs on v7x, harmless elsewhere
_MAX_BLOCK_ROWS = 2048    # 4 inputs x 2 bufs x (2048*128*4B) = 8 MiB (fits v5e's 16 MiB)
_GRIDLESS_MAX_ROWS = 128  # launch-overhead regime only


def _round_up(x, m):
    return ((x + m - 1) // m) * m


def _criteria_kernel_single(p0_ref, t0_ref, p1_ref, t1_ref, o_ref, *, inv_n):
    """Whole problem in one VMEM tile: no grid, no init/finalize branches."""
    d0 = p0_ref[...].astype(jnp.float32) - t0_ref[...].astype(jnp.float32)
    d1 = p1_ref[...].astype(jnp.float32) - t1_ref[...].astype(jnp.float32)
    # Both criteria folded into one vector partial; 'mean' scaling applied
    # once to the final scalar (n0 == n1 asserted in the wrapper).
    o_ref[0, 0] = jnp.sum(d0 * d0 + jnp.abs(d1)) * inv_n


def _criteria_kernel_tiled(p0_ref, t0_ref, p1_ref, t1_ref, o_ref, acc_ref, *,
                           total_rows, block_rows, acc_rows, needs_mask, inv_n):
    """Tiled reduction, two-core split on the first (parallel) grid axis."""
    c = pl.program_id(0)          # core slice (parallel)
    i = pl.program_id(1)          # reduction step (arbitrary)

    @pl.when(i == 0)
    def _init():
        acc_ref[...] = jnp.zeros_like(acc_ref)

    # Logical (unclamped) block id -> global row offset of this tile.  Rows
    # past the real data (partial tail / clamped duplicate block) get masked.
    blk = c * pl.num_programs(1) + i
    tile_row0 = blk * block_rows

    acc = acc_ref[...]
    n_chunks = block_rows // acc_rows
    for j in range(n_chunks):     # static unroll; per-chunk working set stays in vregs
        sl = pl.ds(j * acc_rows, acc_rows)
        d0 = p0_ref[sl, :].astype(jnp.float32) - t0_ref[sl, :].astype(jnp.float32)
        d1 = p1_ref[sl, :].astype(jnp.float32) - t1_ref[sl, :].astype(jnp.float32)
        contrib = d0 * d0 + jnp.abs(d1)
        if needs_mask:
            row_ids = (lax.broadcasted_iota(jnp.int32, (acc_rows, _LANES), 0)
                       + (tile_row0 + j * acc_rows))
            contrib = jnp.where(row_ids < total_rows, contrib, 0.0)
        acc = acc + contrib
    acc_ref[...] = acc

    @pl.when(i == pl.num_programs(1) - 1)
    def _finalize():
        # Single cross-lane reduce + single 'mean' scale per core.
        o_ref[0, 0] = jnp.sum(acc_ref[...]) * inv_n


def criteria_forward(prediction, target, *,
                     max_block_rows=_MAX_BLOCK_ROWS,
                     gridless_max_rows=_GRIDLESS_MAX_ROWS):
    """JAX/Pallas equivalent of Criteria(MSELoss(), L1Loss())(prediction, target)."""
    assert isinstance(prediction, (list, tuple)), (
        '`prediction` must be a list or a tuple, got {} instead.'.format(
            type(prediction).__name__))
    assert isinstance(target, (list, tuple)), (
        '`target` must be a list or a tuple, got {} instead.'.format(
            type(target).__name__))
    assert len(prediction) == len(target), (
        'Number of predictions must equal the number of targets. '
        'Got {} predictions but {} targets.'.format(len(prediction), len(target)))
    assert len(prediction) == 2, 'This instantiation aggregates two criteria (MSE + L1).'

    p0, p1 = prediction
    t0, t1 = target
    assert p0.shape == t0.shape and p1.shape == t1.shape
    # TODO(synk): pairs with different total sizes need per-pair tiling/scaling.
    assert p0.size == p1.size, 'this fast path assumes matching pair sizes'

    def _flatten(x):
        x = jnp.asarray(x)
        n = x.size
        # TODO(synk): pad + mask the lane tail for sizes not divisible by 128.
        assert n % _LANES == 0, 'total element count must be a multiple of 128'
        return x.reshape(-1, _LANES)   # contiguous reshape: no HBM copy

    p0f, t0f, p1f, t1f = map(_flatten, (p0, t0, p1, t1))
    rows = p0f.shape[0]
    inv_n = 1.0 / float(p0f.size)      # shared 'mean' scale (n0 == n1)

    if rows <= gridless_max_rows:
        # Launch-overhead regime: one gridless invocation, full-array VMEM blocks.
        out = pl.pallas_call(
            functools.partial(_criteria_kernel_single, inv_n=inv_n),
            out_shape=jax.ShapeDtypeStruct((1, 1), jnp.float32),
            in_specs=[pl.BlockSpec(memory_space=pltpu.MemorySpace.VMEM)] * 4,
            out_specs=pl.BlockSpec(memory_space=pltpu.MemorySpace.SMEM),
        )(p0f, t0f, p1f, t1f)
        return out[0, 0]

    # ---- tiled, pipelined, two-core path ----
    block_rows = min(int(max_block_rows), _round_up(pl.cdiv(rows, 4), _ACC_ROWS))
    block_rows = max(8, (block_rows // 8) * 8)            # (8,128) block constraint
    block_rows = min(block_rows, _round_up(rows, 8))      # don't exceed the data
    acc_rows = min(_ACC_ROWS, block_rows)
    block_rows -= block_rows % acc_rows                   # integral number of chunks

    num_blocks = pl.cdiv(rows, block_rows)
    steps_per_core = pl.cdiv(num_blocks, _N_CORES)
    needs_mask = (_N_CORES * steps_per_core * block_rows != rows)

    def in_map(c, i):
        # Clamp so the DMA never walks past the last block; the kernel masks
        # by the *logical* block id, so clamped duplicates contribute zero.
        return (jnp.minimum(c * steps_per_core + i, num_blocks - 1), 0)

    tile_spec = pl.BlockSpec((block_rows, _LANES), in_map)

    out = pl.pallas_call(
        functools.partial(_criteria_kernel_tiled,
                          total_rows=rows, block_rows=block_rows,
                          acc_rows=acc_rows, needs_mask=needs_mask, inv_n=inv_n),
        out_shape=jax.ShapeDtypeStruct((_N_CORES, 1), jnp.float32),
        grid_spec=pltpu.PrefetchScalarGridSpec(
            num_scalar_prefetch=0,
            grid=(_N_CORES, steps_per_core),
            in_specs=[tile_spec] * 4,
            out_specs=pl.BlockSpec((1, 1), lambda c, i: (c, 0),
                                   memory_space=pltpu.MemorySpace.SMEM),
            scratch_shapes=[pltpu.VMEM((acc_rows, _LANES), jnp.float32)],
        ),
        compiler_params=pltpu.CompilerParams(
            dimension_semantics=("parallel", "arbitrary"),
            vmem_limit_bytes=32 * 1024 * 1024),
    )(p0f, t0f, p1f, t1f)
    # reduce(lambda x, y: x + y, losses) across the two per-core partials.
    return jnp.sum(out)


def _reference(prediction, target):
    p0, p1 = prediction
    t0, t1 = target
    mse = jnp.mean((p0.astype(jnp.float32) - t0.astype(jnp.float32)) ** 2)
    l1 = jnp.mean(jnp.abs(p1.astype(jnp.float32) - t1.astype(jnp.float32)))
    return mse + l1


if __name__ == "__main__":
    key = jax.random.PRNGKey(0)
    k0, k1, k2, k3 = jax.random.split(key, 4)

    # NCHW inputs, small shapes
    shape = (2, 4, 16, 16)
    p0 = jax.random.normal(k0, shape, dtype=jnp.float32)
    t0 = jax.random.normal(k1, shape, dtype=jnp.float32)
    p1 = jax.random.normal(k2, shape, dtype=jnp.float32)
    t1 = jax.random.normal(k3, shape, dtype=jnp.float32)

    prediction = [p0, p1]
    target = [t0, t1]

    ref = _reference(prediction, target)

    # Gridless fast path (the one used for this problem size).
    loss = jax.block_until_ready(criteria_forward(prediction, target))
    assert jnp.allclose(loss, ref, rtol=1e-5, atol=1e-5), (loss, ref)

    # Force the tiled two-core path (grid=(2, steps)) on the same small input.
    loss_tiled = jax.block_until_ready(
        criteria_forward(prediction, target, gridless_max_rows=0, max_block_rows=8))
    assert jnp.allclose(loss_tiled, ref, rtol=1e-5, atol=1e-5), (loss_tiled, ref)

    # Exercise the masked-tail path: 1920 elements -> 15 rows (not a multiple of 8).
    shape_odd = (2, 4, 16, 15)
    q0 = jax.random.normal(k0, shape_odd, dtype=jnp.float32)
    s0 = jax.random.normal(k1, shape_odd, dtype=jnp.float32)
    q1 = jax.random.normal(k2, shape_odd, dtype=jnp.float32)
    s1 = jax.random.normal(k3, shape_odd, dtype=jnp.float32)
    ref_odd = _reference([q0, q1], [s0, s1])
    loss_odd = jax.block_until_ready(
        criteria_forward([q0, q1], [s0, s1], gridless_max_rows=0, max_block_rows=8))
    assert jnp.allclose(loss_odd, ref_odd, rtol=1e-5, atol=1e-5), (loss_odd, ref_odd)

    print("KERNEL_OK")
</pallas_src>

<mosaic_0001>
module attributes {stable_mosaic.version = 11 : i64} {
  func.func @_criteria_kernel_single(%arg0: memref<16x128xf32, #tpu.memory_space<vmem>>, %arg1: memref<16x128xf32, #tpu.memory_space<vmem>>, %arg2: memref<16x128xf32, #tpu.memory_space<vmem>>, %arg3: memref<16x128xf32, #tpu.memory_space<vmem>>, %arg4: memref<1x1xf32, #tpu.memory_space<smem>>) attributes {dimension_semantics = [], scalar_prefetch = 0 : i64, scratch_operands = 0 : i64, tpu.core_type = #tpu.core_type<tc>} {
    %c0 = arith.constant 0 : index
    %c0_0 = arith.constant 0 : index
    %0 = vector.load %arg0[%c0, %c0_0] : memref<16x128xf32, #tpu.memory_space<vmem>>, vector<16x128xf32>
    %c0_1 = arith.constant 0 : index
    %c0_2 = arith.constant 0 : index
    %1 = vector.load %arg1[%c0_1, %c0_2] : memref<16x128xf32, #tpu.memory_space<vmem>>, vector<16x128xf32>
    %2 = arith.subf %0, %1 : vector<16x128xf32>
    %c0_3 = arith.constant 0 : index
    %c0_4 = arith.constant 0 : index
    %3 = vector.load %arg2[%c0_3, %c0_4] : memref<16x128xf32, #tpu.memory_space<vmem>>, vector<16x128xf32>
    %c0_5 = arith.constant 0 : index
    %c0_6 = arith.constant 0 : index
    %4 = vector.load %arg3[%c0_5, %c0_6] : memref<16x128xf32, #tpu.memory_space<vmem>>, vector<16x128xf32>
    %5 = arith.subf %3, %4 : vector<16x128xf32>
    %6 = arith.mulf %2, %2 : vector<16x128xf32>
    %7 = math.absf %5 : vector<16x128xf32>
    %8 = arith.addf %6, %7 : vector<16x128xf32>
    %9 = vector.shape_cast %8 : vector<16x128xf32> to vector<1x16x128xf32>
    %cst = arith.constant dense<0.000000e+00> : vector<1xf32>
    %10 = vector.multi_reduction <add>, %9, %cst [1, 2] : vector<1x16x128xf32> to vector<1xf32>
    %11 = vector.shape_cast %10 : vector<1xf32> to vector<1x1x1xf32>
    %12 = vector.extract %11[0, 0, 0] : f32 from vector<1x1x1xf32>
    %cst_7 = arith.constant 4.8828125E-4 : f32
    %13 = arith.mulf %12, %cst_7 : f32
    %c0_8 = arith.constant 0 : index
    %c0_9 = arith.constant 0 : index
    %14 = memref.load %arg4[%c0_8, %c0_9] : memref<1x1xf32, #tpu.memory_space<smem>>
    memref.store %13, %arg4[%c0_8, %c0_9] : memref<1x1xf32, #tpu.memory_space<smem>>
    return
  }
}

</mosaic_0001>

<llo_original>
// kernel: tpu_custom_call.1
$region0: #{tpu_custom_call.1}
  #allocation0 [shape = 'u32[]', space=smem, size = 0x4, offset = 0x4, fixed_abs, tag = 'smem constant byte address 0x4 - core index']
  #allocation1 [shape = 'u32[72,128]{1,0:T(1,128)}', space=vmem, size = 0x9000, scoped, tag = 'internal scratch']
  %s0 = inlined_call_operand.hbm [shape: f32[16,128], index: 0, kind: input, shape index: {}]
  %s1 = inlined_call_operand.hbm [shape: f32[16,128], index: 1, kind: input, shape index: {}]
  %s2 = inlined_call_operand.hbm [shape: f32[16,128], index: 2, kind: input, shape index: {}]
  %s3 = inlined_call_operand.hbm [shape: f32[16,128], index: 3, kind: input, shape index: {}]
  %s4 = inlined_call_operand.hbm [shape: f32[1,1], index: 4, kind: output, shape index: {}]
  %s5 = sld [smem:[#allocation0]]
  $region42: #{tpu_custom_call.1} parent=0
    _
  %s7 = ssub.s32 1, %s5
  %s8 = scalar_select 0, %s7, %s5
  $region1: #{tpu_custom_call.1} parent=0
    #allocation2 [shape = 'u8[8192]{0}', space=vmem, size = 0x2000, scoped, tag = 'input window, operand 0, single buffered']
    #allocation3 [shape = 's32[1]{0}', space=sflag, size = 0x4, scoped, tag = 'scoped memory for tpu_custom_call.1']
    #allocation4 [shape = 's32[1]{0}', space=sflag, size = 0x4, scoped, tag = 'scoped memory for tpu_custom_call.1']
    #allocation5 [shape = 'u8[8192]{0}', space=vmem, size = 0x2000, scoped, tag = 'input window, operand 1, single buffered']
    #allocation6 [shape = 's32[1]{0}', space=sflag, size = 0x4, scoped, tag = 'scoped memory for tpu_custom_call.1']
    #allocation7 [shape = 'u8[8192]{0}', space=vmem, size = 0x2000, scoped, tag = 'input window, operand 2, single buffered']
    #allocation8 [shape = 'u8[8192]{0}', space=vmem, size = 0x2000, scoped, tag = 'input window, operand 3, single buffered']
    #allocation9 [shape = 's32[1]{0}', space=sflag, size = 0x4, scoped, tag = 'scoped memory for tpu_custom_call.1']
    #allocation10 [shape = 'u8[512]{0}', space=smem, size = 0x200, scoped, tag = 'output window, operand 0, single buffered']
    %9 = vsyncpa [#allocation3], 0
    %10 = vsyncpa [#allocation6], 0
    %11 = vsyncpa [#allocation9], 0
    %12 = vsyncpa [#allocation4], 0
    // Predicated region
    $region2: #{tpu_custom_call.1} parent=1 // pred_check
      _
    $region3: #{tpu_custom_call.1} parent=1 // pred_check_branch
      %14 = sbr.rel (0) target = $region5
    $region4: #{tpu_custom_call.1} parent=1 // pred_region
      %16 = vsyncadd [#allocation3], 0
      %s17 = sshll.u32 %s0, 4
      %s18 = int_to_ptr.hbm [resolvable:$true] %s17
      %s19 = sshll.u32 [#allocation2], 4
      %s20 = int_to_ptr.vmem [resolvable:$true] %s19
      %25 = dma.hbm_to_vmem [thread:$0]  %s18, 256, %s20, [#allocation3], 128, 128, 8
    $region5: #{tpu_custom_call.1} parent=1 // pred_fallthru
      _
    // Predicated region
    $region6: #{tpu_custom_call.1} parent=1 // pred_check
      _
    $region7: #{tpu_custom_call.1} parent=1 // pred_check_branch
      %27 = sbr.rel (0) target = $region9
    $region8: #{tpu_custom_call.1} parent=1 // pred_region
      %29 = vsyncadd [#allocation6], 0
      %s30 = sshll.u32 %s1, 4
      %s31 = int_to_ptr.hbm [resolvable:$true] %s30
      %s32 = sshll.u32 [#allocation5], 4
      %s33 = int_to_ptr.vmem [resolvable:$true] %s32
      %38 = dma.hbm_to_vmem [thread:$0]  %s31, 256, %s33, [#allocation6], 128, 128, 8
    $region9: #{tpu_custom_call.1} parent=1 // pred_fallthru
      _
    // Predicated region
    $region10: #{tpu_custom_call.1} parent=1 // pred_check
      _
    $region11: #{tpu_custom_call.1} parent=1 // pred_check_branch
      %40 = sbr.rel (0) target = $region13
    $region12: #{tpu_custom_call.1} parent=1 // pred_region
      %42 = vsyncadd [#allocation6], 0
      %s43 = sshll.u32 %s2, 4
      %s44 = int_to_ptr.hbm [resolvable:$true] %s43
      %s45 = sshll.u32 [#allocation7], 4
      %s46 = int_to_ptr.vmem [resolvable:$true] %s45
      %51 = dma.hbm_to_vmem [thread:$0]  %s44, 256, %s46, [#allocation6], 128, 128, 8
    $region13: #{tpu_custom_call.1} parent=1 // pred_fallthru
      _
    // Predicated region
    $region14: #{tpu_custom_call.1} parent=1 // pred_check
      _
    $region15: #{tpu_custom_call.1} parent=1 // pred_check_branch
      %53 = sbr.rel (0) target = $region17
    $region16: #{tpu_custom_call.1} parent=1 // pred_region
      %55 = vsyncadd [#allocation9], 0
      %s56 = sshll.u32 %s3, 4
      %s57 = int_to_ptr.hbm [resolvable:$true] %s56
      %s58 = sshll.u32 [#allocation8], 4
      %s59 = int_to_ptr.vmem [resolvable:$true] %s58
      %64 = dma.hbm_to_vmem [thread:$0]  %s57, 256, %s59, [#allocation9], 128, 128, 8
    $region17: #{tpu_custom_call.1} parent=1 // pred_fallthru
      _
    // Predicated region
    $region18: #{tpu_custom_call.1} parent=1 // pred_check
      _
    $region19: #{tpu_custom_call.1} parent=1 // pred_check_branch
      %66 = sbr.rel (0) target = $region21
    $region20: #{tpu_custom_call.1} parent=1 // pred_region
      %68 = dma.done [#allocation3], 256
    $region21: #{tpu_custom_call.1} parent=1 // pred_fallthru
      _
    // Predicated region
    $region22: #{tpu_custom_call.1} parent=1 // pred_check
      _
    $region23: #{tpu_custom_call.1} parent=1 // pred_check_branch
      %70 = sbr.rel (0) target = $region25
    $region24: #{tpu_custom_call.1} parent=1 // pred_region
      %72 = dma.done [#allocation6], 256
    $region25: #{tpu_custom_call.1} parent=1 // pred_fallthru
      _
    // Predicated region
    $region26: #{tpu_custom_call.1} parent=1 // pred_check
      _
    $region27: #{tpu_custom_call.1} parent=1 // pred_check_branch
      %74 = sbr.rel (0) target = $region29
    $region28: #{tpu_custom_call.1} parent=1 // pred_region
      %76 = dma.done [#allocation6], 256
    $region29: #{tpu_custom_call.1} parent=1 // pred_fallthru
      _
    // Predicated region
    $region30: #{tpu_custom_call.1} parent=1 // pred_check
      _
    $region31: #{tpu_custom_call.1} parent=1 // pred_check_branch
      %78 = sbr.rel (0) target = $region33
    $region32: #{tpu_custom_call.1} parent=1 // pred_region
      %80 = dma.done [#allocation9], 256
    $region33: #{tpu_custom_call.1} parent=1 // pred_fallthru
      _
    %v81 = vld [vmem:[#allocation2] sm:$0xff]
    %v82 = vld [vmem:[#allocation2 + $0x8] sm:$0xff]
    %v83 = vld [vmem:[#allocation5] sm:$0xff]
    %v84 = vld [vmem:[#allocation5 + $0x8] sm:$0xff]
    %v85 = vsub.f32 %v81, %v83
    %v86 = vsub.f32 %v82, %v84
    %v87 = vld [vmem:[#allocation7] sm:$0xff]
    %v88 = vld [vmem:[#allocation7 + $0x8] sm:$0xff]
    %v89 = vld [vmem:[#allocation8] sm:$0xff]
    %v90 = vld [vmem:[#allocation8 + $0x8] sm:$0xff]
    %v91 = vsub.f32 %v87, %v89
    %v92 = vsub.f32 %v88, %v90
    %v93 = vmul.f32 %v85, %v85
    %v94 = vmul.f32 %v86, %v86
    %v95 = vand.u32 2147483647, %v91
    %v96 = vand.u32 2147483647, %v92
    %v97 = vadd.f32 %v93, %v95
    %v98 = vadd.f32 %v94, %v96
    %v99 = vadd.f32 %v97, %v98
    %100 = vadd.xlane.f32.xlu0 %v99
    %v101 = vpop.xlane.xlu0 %100
    %v102 = vrot.slane %v101, 4
    %v103 = vadd.f32 %v101, %v102
    %v104 = vrot.slane %v103, 2
    %v105 = vadd.f32 %v103, %v104
    %v106 = vrot.slane %v105, 1
    %v107 = vadd.f32 %v105, %v106
    %s108 = vtos %v107
    %s109 = smul.f32 %s108, 0.00048828125
    %s110 = scalar_lea.smem [#allocation10], 0
    %111 = sst [smem:[%s110]] %s109
    // Predicated region
    $region34: #{tpu_custom_call.1} parent=1 // pred_check
      _
    $region35: #{tpu_custom_call.1} parent=1 // pred_check_branch
      %113 = sbr.rel (0) target = $region37
    $region36: #{tpu_custom_call.1} parent=1 // pred_region
      %115 = vsyncadd [#allocation4], 0
      %s117 = sshll.u32 %s4, 4
      %s118 = int_to_ptr.hbm [resolvable:$true] %s117
      %120 = dma.smem_to_hbm [#allocation10], 16, %s118, [#allocation4]
    $region37: #{tpu_custom_call.1} parent=1 // pred_fallthru
      _
    // Predicated region
    $region38: #{tpu_custom_call.1} parent=1 // pred_check
      _
    $region39: #{tpu_custom_call.1} parent=1 // pred_check_branch
      %122 = sbr.rel (0) target = $region41
    $region40: #{tpu_custom_call.1} parent=1 // pred_region
      %124 = dma.done [#allocation4], 16
    $region41: #{tpu_custom_call.1} parent=1 // pred_fallthru
      _
    %125 = sfence
    %126 = vsyncpa [#allocation3], 1
    %127 = vsyncpa [#allocation6], 1
    %128 = vsyncpa [#allocation9], 1
    %129 = vsyncpa [#allocation4], 1

</llo_original>
